<compile_context>
chip_gen: v7x
topology: tpu7x:2x2x1
jax: 0.10.0
libtpu: 0.0.40
codegen_flags: <defaults>
</compile_context>

<pallas_src>
import functools

import jax
import jax.numpy as jnp
from jax import lax
from jax.experimental import pallas as pl
from jax.experimental.pallas import tpu as pltpu


def _round_up(x, m):
    return ((x + m - 1) // m) * m


# ---------------------------------------------------------------------------
# Pass 1: nodes -> hyperedges.   e_feat[E, F] = b_inv * (H^T @ Xagg)
# grid = (E_tiles, N_reduction_tiles); reduction over nodes is the last axis.
# ---------------------------------------------------------------------------
def _edge_aggregate_kernel(h_ref, x_ref, binv_ref, e_ref, acc_ref):
    nred = pl.program_id(1)

    @pl.when(nred == 0)
    def _init():
        acc_ref[...] = jnp.zeros_like(acc_ref)

    h = h_ref[...].astype(jnp.float32)      # [TN, TE]  bf16 in HBM, upcast in vregs
    x = x_ref[...]                          # [TN, F]   f32
    # Contract over the node axis directly (no h.T materialization / XLU transpose).
    acc_ref[...] += lax.dot_general(
        h, x,
        dimension_numbers=(((0,), (0,)), ((), ())),
        preferred_element_type=jnp.float32)  # [TE, F]

    @pl.when(nred == pl.num_programs(1) - 1)
    def _finalize():
        e_ref[...] = (acc_ref[...] * binv_ref[...]).astype(e_ref.dtype)


# ---------------------------------------------------------------------------
# Pass 2: hyperedges -> nodes.   out[N, Fout] = (d_inv * (H @ e_feat)) [@ W]
# grid = (N_tiles, E_reduction_tiles); reduction over hyperedges is the last axis.
# ---------------------------------------------------------------------------
def _node_aggregate_kernel(h_ref, e_ref, dinv_ref, *rest, apply_w):
    if apply_w:
        w_ref, out_ref, acc_ref = rest
    else:
        out_ref, acc_ref = rest
        w_ref = None
    ered = pl.program_id(1)

    @pl.when(ered == 0)
    def _init():
        acc_ref[...] = jnp.zeros_like(acc_ref)

    h = h_ref[...].astype(jnp.float32)      # [TN, TE]
    acc_ref[...] += jnp.dot(h, e_ref[...], preferred_element_type=jnp.float32)  # [TN, F]

    @pl.when(ered == pl.num_programs(1) - 1)
    def _finalize():
        res = acc_ref[...] * dinv_ref[...]                      # f32 VPU scaling
        if apply_w:
            res = jnp.dot(res, w_ref[...], preferred_element_type=jnp.float32)
        out_ref[...] = res.astype(out_ref.dtype)


def hypergraph_conv(x, edge_index, weight, num_edges, *,
                    tile_n=1024, tile_e=1024, vmem_budget=24 * 1024 * 1024):
    """HypergraphConv forward (use_attention=False, heads=1, bias=False).

    x:          [N, Fin]   float32 node features
    edge_index: [2, nnz]   int32   (row 0: node idx, row 1: hyperedge idx)
    weight:     [Fin, Fout] float32
    num_edges:  static number of hyperedges E
    """
    n, f_in = x.shape
    f_out = weight.shape[1]

    # Apply Theta on the smaller feature side.
    apply_w_late = f_in <= f_out          # fuse W into pass-2 finalize
    f_in_p = _round_up(f_in, 128)
    f_out_p = _round_up(f_out, 128)
    f_agg_p = f_in_p if apply_w_late else f_out_p

    # Tile sizes (lane-dense, tile-aligned), auto-shrunk to fit a VMEM budget so the
    # kernel stays inside scoped VMEM on v5e/v6e/v7x while using the biggest tiles
    # possible (bigger tiles => less X / e_feat re-streaming across the reduction).
    n_base = _round_up(n, 8)
    e_base = _round_up(num_edges, 128)
    tn = min(_round_up(tile_n, 8), n_base)
    te = min(_round_up(tile_e, 128), e_base)

    def _vmem_bytes(tn_, te_):
        # double-buffered inputs/outputs + single accumulator, per pass
        p1 = (2 * tn_ * te_ * 2          # H tile (bf16)
              + 2 * tn_ * f_agg_p * 4    # X tile
              + 2 * te_ * 4              # b_inv tile
              + 3 * te_ * f_agg_p * 4)   # e_feat out tile (x2) + accumulator
        p2 = (2 * tn_ * te_ * 2          # H tile (bf16)
              + 2 * te_ * f_agg_p * 4    # e_feat tile
              + 2 * tn_ * 4              # d_inv tile
              + 2 * tn_ * f_out_p * 4    # out tile
              + tn_ * f_agg_p * 4)       # accumulator
        if apply_w_late:
            p2 += 2 * f_in_p * f_out_p * 4   # resident W block
        return max(p1, p2)

    while _vmem_bytes(tn, te) > vmem_budget:
        if te > 128 and te >= tn:
            te = max(128, _round_up(te // 2, 128))
        elif tn > 8:
            tn = max(8, _round_up(tn // 2, 8))
        elif te > 128:
            te = max(128, _round_up(te // 2, 128))
        else:
            break

    n_p = _round_up(n_base, tn)
    e_p = _round_up(e_base, te)

    rows = edge_index[0].astype(jnp.int32)
    cols = edge_index[1].astype(jnp.int32)

    # Dense incidence matrix (scatter-add: duplicate incidences counted, like PyG).
    h = jnp.zeros((n_p, e_p), jnp.float32).at[rows, cols].add(1.0)
    h = h.astype(jnp.bfloat16)            # small integer counts -> exact in bf16

    # Degree inverses precomputed from edge_index (f32, O(nnz)); padded entries stay 0.
    deg_n = jnp.zeros((n_p,), jnp.float32).at[rows].add(1.0)
    deg_e = jnp.zeros((e_p,), jnp.float32).at[cols].add(1.0)
    d_inv = jnp.where(deg_n > 0.0, 1.0 / deg_n, 0.0).reshape(n_p, 1)
    b_inv = jnp.where(deg_e > 0.0, 1.0 / deg_e, 0.0).reshape(e_p, 1)

    # Padded features / weight.
    x_p = jnp.zeros((n_p, f_in_p), jnp.float32).at[:n, :f_in].set(x.astype(jnp.float32))
    w_p = jnp.zeros((f_in_p, f_out_p), jnp.float32).at[:f_in, :f_out].set(
        weight.astype(jnp.float32))

    if apply_w_late:
        x_agg = x_p                        # aggregate in Fin space, W fused in pass 2
    else:
        x_agg = jnp.dot(x_p, w_p, preferred_element_type=jnp.float32,
                        precision=lax.Precision.HIGHEST)       # shrink features first

    cparams = pltpu.CompilerParams(
        dimension_semantics=("parallel", "arbitrary"),
        vmem_limit_bytes=32 * 1024 * 1024,   # safe on v5e/v6e/v7x; budget stays below
    )

    # ---------------- Pass 1: e_feat = b_inv * (H^T @ x_agg) ----------------
    e_feat = pl.pallas_call(
        _edge_aggregate_kernel,
        out_shape=jax.ShapeDtypeStruct((e_p, f_agg_p), jnp.float32),
        grid=(e_p // te, n_p // tn),
        in_specs=[
            pl.BlockSpec((tn, te), lambda ei, ni: (ni, ei)),        # H tile (bf16)
            pl.BlockSpec((tn, f_agg_p), lambda ei, ni: (ni, 0)),    # X tile
            pl.BlockSpec((te, 1), lambda ei, ni: (ei, 0)),          # b_inv tile
        ],
        out_specs=pl.BlockSpec((te, f_agg_p), lambda ei, ni: (ei, 0)),
        scratch_shapes=[pltpu.VMEM((te, f_agg_p), jnp.float32)],
        compiler_params=cparams,
    )(h, x_agg, b_inv)

    # ---------------- Pass 2: out = (d_inv * (H @ e_feat)) [@ W] ------------
    in_specs2 = [
        pl.BlockSpec((tn, te), lambda ni, ei: (ni, ei)),            # H tile (bf16)
        pl.BlockSpec((te, f_agg_p), lambda ni, ei: (ei, 0)),        # e_feat tile
        pl.BlockSpec((tn, 1), lambda ni, ei: (ni, 0)),              # d_inv tile
    ]
    in_args2 = [h, e_feat, d_inv]
    if apply_w_late:
        in_specs2.append(pl.BlockSpec((f_in_p, f_out_p), lambda ni, ei: (0, 0)))
        in_args2.append(w_p)

    out_p = pl.pallas_call(
        functools.partial(_node_aggregate_kernel, apply_w=apply_w_late),
        out_shape=jax.ShapeDtypeStruct((n_p, f_out_p), jnp.float32),
        grid=(n_p // tn, e_p // te),
        in_specs=in_specs2,
        out_specs=pl.BlockSpec((tn, f_out_p), lambda ni, ei: (ni, 0)),
        scratch_shapes=[pltpu.VMEM((tn, f_agg_p), jnp.float32)],
        compiler_params=cparams,
    )(*in_args2)

    return out_p[:n, :f_out]


def hypergraph_conv_ref(x, edge_index, weight, num_edges):
    """Pure-JAX f32 reference (same dense math as PyG HypergraphConv, bias=False)."""
    n = x.shape[0]
    h = jnp.zeros((n, num_edges), jnp.float32).at[edge_index[0], edge_index[1]].add(1.0)
    hp = lax.Precision.HIGHEST
    x1 = jnp.dot(x, weight, precision=hp)
    deg_e = h.sum(0)
    deg_n = h.sum(1)
    b_inv = jnp.where(deg_e > 0, 1.0 / deg_e, 0.0)
    d_inv = jnp.where(deg_n > 0, 1.0 / deg_n, 0.0)
    e_feat = jnp.dot(h.T, x1, precision=hp) * b_inv[:, None]
    return jnp.dot(h, e_feat, precision=hp) * d_inv[:, None]


if __name__ == "__main__":
    key = jax.random.PRNGKey(0)

    def run_case(n, e, dim_in, dim_out, nnz, key, atol=1e-4, rtol=1e-4, **tile_kw):
        k_x, k_w, k_src, k_dst = jax.random.split(key, 4)
        x = jax.random.normal(k_x, (n, dim_in), dtype=jnp.float32)
        scale = (6.0 / (dim_in + dim_out)) ** 0.5      # glorot-ish Theta, bias=False
        weight = jax.random.uniform(k_w, (dim_in, dim_out), jnp.float32, -scale, scale)
        edge_index = jnp.stack([
            jax.random.randint(k_src, (nnz,), 0, n, dtype=jnp.int32),
            jax.random.randint(k_dst, (nnz,), 0, e, dtype=jnp.int32),
        ])
        out = jax.block_until_ready(hypergraph_conv(x, edge_index, weight, e, **tile_kw))
        ref = hypergraph_conv_ref(x, edge_index, weight, e)
        assert out.shape == (n, dim_out)
        assert jnp.allclose(out, ref, atol=atol, rtol=rtol)

    k1, k2, k3 = jax.random.split(key, 3)
    # Fin < Fout path (W fused into pass-2 finalize).
    run_case(n=32, e=16, dim_in=16, dim_out=32, nnz=96, key=k1)
    # Fin > Fout path (features shrunk before aggregation).
    run_case(n=32, e=16, dim_in=32, dim_out=16, nnz=96, key=k2)
    # Multi-tile grids: exercises the accumulate-across-reduction path and finalize.
    run_case(n=300, e=520, dim_in=48, dim_out=24, nnz=4000, key=k3,
             atol=1e-3, rtol=1e-3, tile_n=128, tile_e=256)

    print("KERNEL_OK")
</pallas_src>

<mosaic_0001>
module attributes {stable_mosaic.version = 11 : i64} {
  func.func @_edge_aggregate_kernel(%arg0: i32, %arg1: i32, %arg2: memref<32x128xbf16, #tpu.memory_space<vmem>>, %arg3: memref<32x128xf32, #tpu.memory_space<vmem>>, %arg4: memref<128x1xf32, #tpu.memory_space<vmem>>, %arg5: memref<128x128xf32, #tpu.memory_space<vmem>>, %arg6: memref<128x128xf32, #tpu.memory_space<vmem>>) attributes {dimension_semantics = [#tpu.dimension_semantics<parallel>, #tpu.dimension_semantics<arbitrary>], iteration_bounds = array<i64: 1, 1>, scalar_prefetch = 0 : i64, scratch_operands = 1 : i64, tpu.core_type = #tpu.core_type<tc>, window_params = [{transform_indices = @transform_0, window_bounds = array<i64: 32, 128>}, {transform_indices = @transform_1, window_bounds = array<i64: 32, 128>}, {transform_indices = @transform_2, window_bounds = array<i64: 128, 1>}, {transform_indices = @transform_3, window_bounds = array<i64: 128, 128>}]} {
    %c0_i32 = arith.constant 0 : i32
    %0 = arith.cmpi eq, %arg1, %c0_i32 : i32
    %1 = arith.extui %0 : i1 to i32
    %c0_i32_0 = arith.constant 0 : i32
    %2 = arith.cmpi ne, %1, %c0_i32_0 : i32
    scf.if %2 {
      %cst_10 = arith.constant 0.000000e+00 : f32
      %13 = vector.broadcast %cst_10 : f32 to vector<128x128xf32>
      %c0_11 = arith.constant 0 : index
      %c0_12 = arith.constant 0 : index
      %14 = vector.load %arg6[%c0_11, %c0_12] : memref<128x128xf32, #tpu.memory_space<vmem>>, vector<128x128xf32>
      tpu.vector_store %arg6[%c0_11, %c0_12], %13 {strides = array<i32>} : memref<128x128xf32, #tpu.memory_space<vmem>>, vector<128x128xf32>,
    } else {
    }
    %c0 = arith.constant 0 : index
    %c0_1 = arith.constant 0 : index
    %3 = vector.load %arg2[%c0, %c0_1] : memref<32x128xbf16, #tpu.memory_space<vmem>>, vector<32x128xbf16>
    %4 = arith.extf %3 : vector<32x128xbf16> to vector<32x128xf32>
    %c0_2 = arith.constant 0 : index
    %c0_3 = arith.constant 0 : index
    %5 = vector.load %arg3[%c0_2, %c0_3] : memref<32x128xf32, #tpu.memory_space<vmem>>, vector<32x128xf32>
    %c0_4 = arith.constant 0 : index
    %c0_5 = arith.constant 0 : index
    %6 = vector.load %arg6[%c0_4, %c0_5] : memref<128x128xf32, #tpu.memory_space<vmem>>, vector<128x128xf32>
    %cst = arith.constant dense<0.000000e+00> : vector<128x128xf32>
    %7 = tpu.matmul %4, %5, %cst {dimension_numbers = #tpu.dot_dimension_numbers<[0], [0], [1], [1], [0, 1, 1, 1], [], []>} : vector<32x128xf32>, vector<32x128xf32>, vector<128x128xf32> -> vector<128x128xf32>
    %8 = arith.addf %6, %7 : vector<128x128xf32>
    %c0_6 = arith.constant 0 : index
    %c0_7 = arith.constant 0 : index
    %9 = vector.load %arg6[%c0_6, %c0_7] : memref<128x128xf32, #tpu.memory_space<vmem>>, vector<128x128xf32>
    tpu.vector_store %arg6[%c0_6, %c0_7], %8 {strides = array<i32>} : memref<128x128xf32, #tpu.memory_space<vmem>>, vector<128x128xf32>,
    %c0_i32_8 = arith.constant 0 : i32
    %10 = arith.cmpi eq, %arg1, %c0_i32_8 : i32
    %11 = arith.extui %10 : i1 to i32
    %c0_i32_9 = arith.constant 0 : i32
    %12 = arith.cmpi ne, %11, %c0_i32_9 : i32
    scf.if %12 {
      %c0_10 = arith.constant 0 : index
      %c0_11 = arith.constant 0 : index
      %13 = vector.load %arg6[%c0_10, %c0_11] : memref<128x128xf32, #tpu.memory_space<vmem>>, vector<128x128xf32>
      %c0_12 = arith.constant 0 : index
      %c0_13 = arith.constant 0 : index
      %14 = vector.load %arg4[%c0_12, %c0_13] : memref<128x1xf32, #tpu.memory_space<vmem>>, vector<128x1xf32>
      %15 = vector.broadcast %14 : vector<128x1xf32> to vector<128x128xf32>
      %16 = arith.mulf %13, %15 : vector<128x128xf32>
      %c0_14 = arith.constant 0 : index
      %c0_15 = arith.constant 0 : index
      %17 = vector.load %arg5[%c0_14, %c0_15] : memref<128x128xf32, #tpu.memory_space<vmem>>, vector<128x128xf32>
      tpu.vector_store %arg5[%c0_14, %c0_15], %16 {strides = array<i32>} : memref<128x128xf32, #tpu.memory_space<vmem>>, vector<128x128xf32>,
    } else {
    }
    return
  }
  func.func @transform_0(%arg0: i32, %arg1: i32) -> (i32, i32) {
    %c0_i32 = arith.constant 0 : i32
    return %arg1, %arg0 : i32, i32
  }
  func.func @transform_1(%arg0: i32, %arg1: i32) -> (i32, i32) {
    %c0_i32 = arith.constant 0 : i32
    %c0_i32_0 = arith.constant 0 : i32
    return %arg1, %c0_i32 : i32, i32
  }
  func.func @transform_2(%arg0: i32, %arg1: i32) -> (i32, i32) {
    %c0_i32 = arith.constant 0 : i32
    %c0_i32_0 = arith.constant 0 : i32
    return %arg0, %c0_i32 : i32, i32
  }
  func.func @transform_3(%arg0: i32, %arg1: i32) -> (i32, i32) {
    %c0_i32 = arith.constant 0 : i32
    %c0_i32_0 = arith.constant 0 : i32
    return %arg0, %c0_i32 : i32, i32
  }
}

</mosaic_0001>

<llo_original>
// kernel: tpu_custom_call.1
$region0: #{tpu_custom_call.1}
  #allocation0 [shape = 'u32[]', space=smem, size = 0x4, offset = 0x4, fixed_abs, tag = 'smem constant byte address 0x4 - core index']
  #allocation1 [shape = 'u32[144,128]{1,0:T(1,128)}', space=vmem, size = 0x12000, scoped, tag = 'internal scratch']
  #allocation2 [shape = 'f32[128,128]{1,0:T(8,128)}', space=vmem, size = 0x10000, scoped, tag = 'scratch operand']
  %s0 = inlined_call_operand.vmem [shape: bf16[32,128], index: 0, kind: input, shape index: {}]
  %s1 = inlined_call_operand.vmem [shape: f32[32,128], index: 1, kind: input, shape index: {}]
  %s2 = inlined_call_operand.vmem [shape: f32[128,1], index: 2, kind: input, shape index: {}]
  %s3 = inlined_call_operand.hbm [shape: f32[128,128], index: 3, kind: output, shape index: {}]
  %s4 = sld [smem:[#allocation0]]
  $region30: #{tpu_custom_call.1} parent=0
    _
  %s6 = ssub.s32 1, %s4
  %s7 = scalar_select 0, %s6, %s4
  $region1: #{tpu_custom_call.1} parent=0
    #allocation3 [shape = 'u8[65536]{0}', space=vmem, size = 0x10000, scoped, tag = 'output window, operand 0, single buffered']
    #allocation4 [shape = 's32[1]{0}', space=sflag, size = 0x4, scoped, tag = 'scoped memory for tpu_custom_call.1']
    %8 = vsyncpa [#allocation4], 0
    // Predicated region
    $region2: #{tpu_custom_call.1} parent=1 // pred_check
      _
    $region3: #{tpu_custom_call.1} parent=1 // pred_check_branch
      %10 = sbr.rel (0) target = $region5
    $region4: #{tpu_custom_call.1} parent=1 // pred_region
      _
    $region5: #{tpu_custom_call.1} parent=1 // pred_fallthru
      _
    // Predicated region
    $region6: #{tpu_custom_call.1} parent=1 // pred_check
      _
    $region7: #{tpu_custom_call.1} parent=1 // pred_check_branch
      %12 = sbr.rel (0) target = $region9
    $region8: #{tpu_custom_call.1} parent=1 // pred_region
      _
    $region9: #{tpu_custom_call.1} parent=1 // pred_fallthru
      _
    // Predicated region
    $region10: #{tpu_custom_call.1} parent=1 // pred_check
      _
    $region11: #{tpu_custom_call.1} parent=1 // pred_check_branch
      %14 = sbr.rel (0) target = $region13
    $region12: #{tpu_custom_call.1} parent=1 // pred_region
      _
    $region13: #{tpu_custom_call.1} parent=1 // pred_fallthru
      _
    %p15 = scmp.eq.s32.totalorder 0, 0
    // Predicated region
    $region14: #{tpu_custom_call.1} parent=1 // pred_check
      %p16 = pneg %p15
    $region15: #{tpu_custom_call.1} parent=1 // pred_check_branch
      %18 = sbr.rel (%p16) target = $region17
    $region16: #{tpu_custom_call.1} parent=1 // pred_region
      %19 = vst [vmem:[#allocation2] sm:$0xff] 0.0
      %20 = vst [vmem:[#allocation2 + $0x8] sm:$0xff] 0.0
      %21 = vst [vmem:[#allocation2 + $0x10] sm:$0xff] 0.0
      %22 = vst [vmem:[#allocation2 + $0x18] sm:$0xff] 0.0
      %23 = vst [vmem:[#allocation2 + $0x20] sm:$0xff] 0.0
      %24 = vst [vmem:[#allocation2 + $0x28] sm:$0xff] 0.0
      %25 = vst [vmem:[#allocation2 + $0x30] sm:$0xff] 0.0
      %26 = vst [vmem:[#allocation2 + $0x38] sm:$0xff] 0.0
      %27 = vst [vmem:[#allocation2 + $0x40] sm:$0xff] 0.0
      %28 = vst [vmem:[#allocation2 + $0x48] sm:$0xff] 0.0
      %29 = vst [vmem:[#allocation2 + $0x50] sm:$0xff] 0.0
      %30 = vst [vmem:[#allocation2 + $0x58] sm:$0xff] 0.0
      %31 = vst [vmem:[#allocation2 + $0x60] sm:$0xff] 0.0
      %32 = vst [vmem:[#allocation2 + $0x68] sm:$0xff] 0.0
      %33 = vst [vmem:[#allocation2 + $0x70] sm:$0xff] 0.0
      %34 = vst [vmem:[#allocation2 + $0x78] sm:$0xff] 0.0
    $region17: #{tpu_custom_call.1} parent=1 // pred_fallthru
      _
    %v35 = vld [vmem:[%s0] sm:$0xf]
    %v36 = vld [vmem:[%s0 + $0x4] sm:$0xf]
    %v37 = vld [vmem:[%s0 + $0x8] sm:$0xf]
    %v38 = vld [vmem:[%s0 + $0xc] sm:$0xf]
    %v39 = vunpack.c.l.bf16 %v35
    %v40 = vunpack.c.l.bf16 %v36
    %v41 = vunpack.c.l.bf16 %v37
    %v42 = vunpack.c.l.bf16 %v38
    %v43 = vld [vmem:[%s1] sm:$0xff]
    %v44 = vld [vmem:[%s1 + $0x8] sm:$0xff]
    %v45 = vld [vmem:[%s1 + $0x10] sm:$0xff]
    %v46 = vld [vmem:[%s1 + $0x18] sm:$0xff]
    %v47 = vld [vmem:[#allocation2] sm:$0xff]
    %v48 = vld [vmem:[#allocation2 + $0x8] sm:$0xff]
    %v49 = vld [vmem:[#allocation2 + $0x10] sm:$0xff]
    %v50 = vld [vmem:[#allocation2 + $0x18] sm:$0xff]
    %v51 = vld [vmem:[#allocation2 + $0x20] sm:$0xff]
    %v52 = vld [vmem:[#allocation2 + $0x28] sm:$0xff]
    %v53 = vld [vmem:[#allocation2 + $0x30] sm:$0xff]
    %v54 = vld [vmem:[#allocation2 + $0x38] sm:$0xff]
    %v55 = vld [vmem:[#allocation2 + $0x40] sm:$0xff]
    %v56 = vld [vmem:[#allocation2 + $0x48] sm:$0xff]
    %v57 = vld [vmem:[#allocation2 + $0x50] sm:$0xff]
    %v58 = vld [vmem:[#allocation2 + $0x58] sm:$0xff]
    %v59 = vld [vmem:[#allocation2 + $0x60] sm:$0xff]
    %v60 = vld [vmem:[#allocation2 + $0x68] sm:$0xff]
    %v61 = vld [vmem:[#allocation2 + $0x70] sm:$0xff]
    %v62 = vld [vmem:[#allocation2 + $0x78] sm:$0xff]
    %63 = vxpose.xlu0.b32.start [1/16] %v39, 128
    %64 = vxpose.xlu0.b32.cont [2/16] %v40, 128
    %65 = vxpose.xlu0.b32.cont [3/16] %v41, 128
    %66 = vxpose.xlu0.b32.cont [4/16] %v42, 128
    %67 = vxpose.xlu0.b32.cont [5/16] 0.0, 128
    %68 = vxpose.xlu0.b32.cont [6/16] 0.0, 128
    %69 = vxpose.xlu0.b32.cont [7/16] 0.0, 128
    %70 = vxpose.xlu0.b32.cont [8/16] 0.0, 128
    %71 = vxpose.xlu0.b32.cont [9/16] 0.0, 128
    %72 = vxpose.xlu0.b32.cont [10/16] 0.0, 128
    %73 = vxpose.xlu0.b32.cont [11/16] 0.0, 128
    %74 = vxpose.xlu0.b32.cont [12/16] 0.0, 128
    %75 = vxpose.xlu0.b32.cont [13/16] 0.0, 128
    %76 = vxpose.xlu0.b32.cont [14/16] 0.0, 128
    %77 = vxpose.xlu0.b32.cont [15/16] 0.0, 128
    %78 = vxpose.xlu0.b32.end [16/16] 0.0, 128
    %v79 = vpop.trf.xlu0
    %v80 = vpop.trf.xlu0
    %v81 = vpop.trf.xlu0
    %v82 = vpop.trf.xlu0
    %v83 = vpop.trf.xlu0
    %v84 = vpop.trf.xlu0
    %v85 = vpop.trf.xlu0
    %v86 = vpop.trf.xlu0
    %v87 = vpop.trf.xlu0
    %v88 = vpop.trf.xlu0
    %v89 = vpop.trf.xlu0
    %v90 = vpop.trf.xlu0
    %v91 = vpop.trf.xlu0
    %v92 = vpop.trf.xlu0
    %v93 = vpop.trf.xlu0
    %v94 = vpop.trf.xlu0
    %vm95 = vcmask 261120
    %v97 = vsel %vm95, %v79, 0
    %v100 = vsel %vm95, %v80, 0
    %v103 = vsel %vm95, %v81, 0
    %v106 = vsel %vm95, %v82, 0
    %v109 = vsel %vm95, %v83, 0
    %v112 = vsel %vm95, %v84, 0
    %v115 = vsel %vm95, %v85, 0
    %v118 = vsel %vm95, %v86, 0
    %v121 = vsel %vm95, %v87, 0
    %v124 = vsel %vm95, %v88, 0
    %v127 = vsel %vm95, %v89, 0
    %v130 = vsel %vm95, %v90, 0
    %v133 = vsel %vm95, %v91, 0
    %v136 = vsel %vm95, %v92, 0
    %v139 = vsel %vm95, %v93, 0
    %v142 = vsel %vm95, %v94, 0
    %144 = vmatprep.subr.mxu0 0.0
    %145 = vmatpush1.msra.mxu0 %v43
    %146 = vmatprep.subr.mxu0 0.0
    %147 = vmatpush1.msra.mxu0 %v44
    %148 = vmatprep.subr.mxu0 0.0
    %149 = vmatpush1.msra.mxu0 %v45
    %150 = vmatprep.subr.mxu0 0.0
    %151 = vmatpush1.msra.mxu0 %v46
    %152 = vmatprep.subr.mxu0 0.0
    %153 = vmatpush1.msra.mxu0 0.0
    %154 = vmatprep.subr.mxu0 0.0
    %155 = vmatpush1.msra.mxu0 0.0
    %156 = vmatprep.subr.mxu0 0.0
    %157 = vmatpush1.msra.mxu0 0.0
    %158 = vmatprep.subr.mxu0 0.0
    %159 = vmatpush1.msra.mxu0 0.0
    %160 = vmatprep.subr.mxu0 0.0
    %161 = vmatpush1.msra.mxu0 0.0
    %162 = vmatprep.subr.mxu0 0.0
    %163 = vmatpush1.msra.mxu0 0.0
    %164 = vmatprep.subr.mxu0 0.0
    %165 = vmatpush1.msra.mxu0 0.0
    %166 = vmatprep.subr.mxu0 0.0
    %167 = vmatpush1.msra.mxu0 0.0
    %168 = vmatprep.subr.mxu0 0.0
    %169 = vmatpush1.msra.mxu0 0.0
    %170 = vmatprep.subr.mxu0 0.0
    %171 = vmatpush1.msra.mxu0 0.0
    %172 = vmatprep.subr.mxu0 0.0
    %173 = vmatpush1.msra.mxu0 0.0
    %174 = vmatprep.subr.mxu0 0.0
    %175 = vmatpush1.msra.mxu0 0.0
    %176 = vmatprep.subr.mxu0 0.0
    %177 = vmatpush1.msra.mxu0 0.0
    %178 = vmatprep.subr.mxu0 0.0
    %179 = vmatpush1.msra.mxu0 0.0
    %180 = vmatprep.subr.mxu0 0.0
    %181 = vmatpush1.msra.mxu0 0.0
    %182 = vmatprep.subr.mxu0 0.0
    %183 = vmatpush1.msra.mxu0 0.0
    %184 = vmatprep.subr.mxu0 0.0
    %185 = vmatpush1.msra.mxu0 0.0
    %186 = vmatprep.subr.mxu0 0.0
    %187 = vmatpush1.msra.mxu0 0.0
    %188 = vmatprep.subr.mxu0 0.0
    %189 = vmatpush1.msra.mxu0 0.0
    %190 = vmatprep.subr.mxu0 0.0
    %191 = vmatpush1.msra.mxu0 0.0
    %192 = vmatprep.subr.mxu0 0.0
    %193 = vmatpush1.msra.mxu0 0.0
    %194 = vmatprep.subr.mxu0 0.0
    %195 = vmatpush1.msra.mxu0 0.0
    %196 = vmatprep.subr.mxu0 0.0
    %197 = vmatpush1.msra.mxu0 0.0
    %198 = vmatprep.subr.mxu0 0.0
    %199 = vmatpush1.msra.mxu0 0.0
    %200 = vmatprep.subr.mxu0 0.0
    %201 = vmatpush1.msra.mxu0 0.0
    %202 = vmatprep.subr.mxu0 0.0
    %203 = vmatpush1.msra.mxu0 0.0
    %204 = vmatprep.subr.mxu0 0.0
    %205 = vmatpush1.msra.mxu0 0.0
    %206 = vmatprep.subr.mxu0 0.0
    %207 = vmatpush1.msra.mxu0 0.0
    %208 = vmatprep.mubr.f32.mxu0 0.0
    %209 = vmatmul.mubr.f32.gmra.mrb[0].mxu0 %v97
    %v210 = vpop.f32.mrb[0].mxu0
    %v211 = vadd.f32 0.0, %v210
    %v212 = vpop.f32.mrb[0].mxu0
    %213 = vmatprep.mubr.f32.mxu0 0.0
    %214 = vmatmul.mubr.f32.gmra.mrb[0].mxu0 %v100
    %v215 = vpop.f32.mrb[0].mxu0
    %v216 = vadd.f32 0.0, %v215
    %v217 = vpop.f32.mrb[0].mxu0
    %218 = vmatprep.mubr.f32.mxu0 0.0
    %219 = vmatmul.mubr.f32.gmra.mrb[0].mxu0 %v103
    %v220 = vpop.f32.mrb[0].mxu0
    %v221 = vadd.f32 0.0, %v220
    %v222 = vpop.f32.mrb[0].mxu0
    %223 = vmatprep.mubr.f32.mxu0 0.0
    %224 = vmatmul.mubr.f32.gmra.mrb[0].mxu0 %v106
    %v225 = vpop.f32.mrb[0].mxu0
    %v226 = vadd.f32 0.0, %v225
    %v227 = vpop.f32.mrb[0].mxu0
    %228 = vmatprep.mubr.f32.mxu0 0.0
    %229 = vmatmul.mubr.f32.gmra.mrb[0].mxu0 %v109
    %v230 = vpop.f32.mrb[0].mxu0
    %v231 = vadd.f32 0.0, %v230
    %v232 = vpop.f32.mrb[0].mxu0
    %233 = vmatprep.mubr.f32.mxu0 0.0
    %234 = vmatmul.mubr.f32.gmra.mrb[0].mxu0 %v112
    %v235 = vpop.f32.mrb[0].mxu0
    %v236 = vadd.f32 0.0, %v235
    %v237 = vpop.f32.mrb[0].mxu0
    %238 = vmatprep.mubr.f32.mxu0 0.0
    %239 = vmatmul.mubr.f32.gmra.mrb[0].mxu0 %v115
    %v240 = vpop.f32.mrb[0].mxu0
    %v241 = vadd.f32 0.0, %v240
    %v242 = vpop.f32.mrb[0].mxu0
    %243 = vmatprep.mubr.f32.mxu0 0.0
    %244 = vmatmul.mubr.f32.gmra.mrb[0].mxu0 %v118
    %v245 = vpop.f32.mrb[0].mxu0
    %v246 = vadd.f32 0.0, %v245
    %v247 = vpop.f32.mrb[0].mxu0
    %248 = vmatprep.mubr.f32.mxu0 0.0
    %249 = vmatmul.mubr.f32.gmra.mrb[0].mxu0 %v121
    %v250 = vpop.f32.mrb[0].mxu0
    %v251 = vadd.f32 0.0, %v250
    %v252 = vpop.f32.mrb[0].mxu0
    %253 = vmatprep.mubr.f32.mxu0 0.0
    %254 = vmatmul.mubr.f32.gmra.mrb[0].mxu0 %v124
    %v255 = vpop.f32.mrb[0].mxu0
    %v256 = vadd.f32 0.0, %v255
    %v257 = vpop.f32.mrb[0].mxu0
    %258 = vmatprep.mubr.f32.mxu0 0.0
    %259 = vmatmul.mubr.f32.gmra.mrb[0].mxu0 %v127
    %v260 = vpop.f32.mrb[0].mxu0
    %v261 = vadd.f32 0.0, %v260
    %v262 = vpop.f32.mrb[0].mxu0
    %263 = vmatprep.mubr.f32.mxu0 0.0
    %264 = vmatmul.mubr.f32.gmra.mrb[0].mxu0 %v130
    %v265 = vpop.f32.mrb[0].mxu0
    %v266 = vadd.f32 0.0, %v265
    %v267 = vpop.f32.mrb[0].mxu0
    %268 = vmatprep.mubr.f32.mxu0 0.0
    %269 = vmatmul.mubr.f32.gmra.mrb[0].mxu0 %v133
    %v270 = vpop.f32.mrb[0].mxu0
    %v271 = vadd.f32 0.0, %v270
    %v272 = vpop.f32.mrb[0].mxu0
    %273 = vmatprep.mubr.f32.mxu0 0.0
    %274 = vmatmul.mubr.f32.gmra.mrb[0].mxu0 %v136
    %v275 = vpop.f32.mrb[0].mxu0
    %v276 = vadd.f32 0.0, %v275
    %v277 = vpop.f32.mrb[0].mxu0
    %278 = vmatprep.mubr.f32.mxu0 0.0
    %279 = vmatmul.mubr.f32.gmra.mrb[0].mxu0 %v139
    %v280 = vpop.f32.mrb[0].mxu0
    %v281 = vadd.f32 0.0, %v280
    %v282 = vpop.f32.mrb[0].mxu0
    %283 = vmatprep.mubr.f32.mxu0 0.0
    %284 = vmatmul.mubr.f32.gmra.mrb[0].mxu0 %v142
    %v285 = vpop.f32.mrb[0].mxu0
    %v286 = vadd.f32 0.0, %v285
    %v287 = vpop.f32.mrb[0].mxu0
    %288 = vdwg.mxu0
    %v289 = vadd.f32 %v47, %v211
    %v290 = vadd.f32 %v48, %v216
    %v291 = vadd.f32 %v49, %v221
    %v292 = vadd.f32 %v50, %v226
    %v293 = vadd.f32 %v51, %v231
    %v294 = vadd.f32 %v52, %v236
    %v295 = vadd.f32 %v53, %v241
    %v296 = vadd.f32 %v54, %v246
    %v297 = vadd.f32 %v55, %v251
    %v298 = vadd.f32 %v56, %v256
    %v299 = vadd.f32 %v57, %v261
    %v300 = vadd.f32 %v58, %v266
    %v301 = vadd.f32 %v59, %v271
    %v302 = vadd.f32 %v60, %v276
    %v303 = vadd.f32 %v61, %v281
    %v304 = vadd.f32 %v62, %v286
    %305 = vst [vmem:[#allocation2] sm:$0xff] %v289
    %306 = vst [vmem:[#allocation2 + $0x8] sm:$0xff] %v290
    %307 = vst [vmem:[#allocation2 + $0x10] sm:$0xff] %v291
    %308 = vst [vmem:[#allocation2 + $0x18] sm:$0xff] %v292
    %309 = vst [vmem:[#allocation2 + $0x20] sm:$0xff] %v293
    %310 = vst [vmem:[#allocation2 + $0x28] sm:$0xff] %v294
    %311 = vst [vmem:[#allocation2 + $0x30] sm:$0xff] %v295
    %312 = vst [vmem:[#allocation2 + $0x38] sm:$0xff] %v296
    %313 = vst [vmem:[#allocation2 + $0x40] sm:$0xff] %v297
    %314 = vst [vmem:[#allocation2 + $0x48] sm:$0xff] %v298
    %315 = vst [vmem:[#allocation2 + $0x50] sm:$0xff] %v299
    %316 = vst [vmem:[#allocation2 + $0x58] sm:$0xff] %v300
    %317 = vst [vmem:[#allocation2 + $0x60] sm:$0xff] %v301
    %318 = vst [vmem:[#allocation2 + $0x68] sm:$0xff] %v302
    %319 = vst [vmem:[#allocation2 + $0x70] sm:$0xff] %v303
    %320 = vst [vmem:[#allocation2 + $0x78] sm:$0xff] %v304
    // Predicated region
    $region18: #{tpu_custom_call.1} parent=1 // pred_check
      %p321 = pneg %p15
    $region19: #{tpu_custom_call.1} parent=1 // pred_check_branch
      %323 = sbr.rel (%p321) target = $region21
    $region20: #{tpu_custom_call.1} parent=1 // pred_region
      %v324 = vld [vmem:[#allocation2] sm:$0xff]
      %v325 = vld [vmem:[#allocation2 + $0x8] sm:$0xff]
      %v326 = vld [vmem:[#allocation2 + $0x10] sm:$0xff]
      %v327 = vld [vmem:[#allocation2 + $0x18] sm:$0xff]
      %v328 = vld [vmem:[#allocation2 + $0x20] sm:$0xff]
      %v329 = vld [vmem:[#allocation2 + $0x28] sm:$0xff]
      %v330 = vld [vmem:[#allocation2 + $0x30] sm:$0xff]
      %v331 = vld [vmem:[#allocation2 + $0x38] sm:$0xff]
      %v332 = vld [vmem:[#allocation2 + $0x40] sm:$0xff]
      %v333 = vld [vmem:[#allocation2 + $0x48] sm:$0xff]
      %v334 = vld [vmem:[#allocation2 + $0x50] sm:$0xff]
      %v335 = vld [vmem:[#allocation2 + $0x58] sm:$0xff]
      %v336 = vld [vmem:[#allocation2 + $0x60] sm:$0xff]
      %v337 = vld [vmem:[#allocation2 + $0x68] sm:$0xff]
      %v338 = vld [vmem:[#allocation2 + $0x70] sm:$0xff]
      %v339 = vld [vmem:[#allocation2 + $0x78] sm:$0xff]
      %v340 = vld [vmem:[%s2] sm:$0xff]
      %v341 = vld [vmem:[%s2 + $0x8] sm:$0xff]
      %v342 = vld [vmem:[%s2 + $0x10] sm:$0xff]
      %v343 = vld [vmem:[%s2 + $0x18] sm:$0xff]
      %v344 = vld [vmem:[%s2 + $0x20] sm:$0xff]
      %v345 = vld [vmem:[%s2 + $0x28] sm:$0xff]
      %v346 = vld [vmem:[%s2 + $0x30] sm:$0xff]
      %v347 = vld [vmem:[%s2 + $0x38] sm:$0xff]
      %v348 = vld [vmem:[%s2 + $0x40] sm:$0xff]
      %v349 = vld [vmem:[%s2 + $0x48] sm:$0xff]
      %v350 = vld [vmem:[%s2 + $0x50] sm:$0xff]
      %v351 = vld [vmem:[%s2 + $0x58] sm:$0xff]
      %v352 = vld [vmem:[%s2 + $0x60] sm:$0xff]
      %v353 = vld [vmem:[%s2 + $0x68] sm:$0xff]
      %v354 = vld [vmem:[%s2 + $0x70] sm:$0xff]
      %v355 = vld [vmem:[%s2 + $0x78] sm:$0xff]
      %357 = vset.pattern.permute.xlu0 0
      %358 = vperm.xlu0 %357, %v340
      %v359 = vpop.permute.xlu0 %358
      %362 = vset.pattern.permute.xlu0 0
      %363 = vperm.xlu0 %362, %v341
      %v364 = vpop.permute.xlu0 %363
      %367 = vset.pattern.permute.xlu0 0
      %368 = vperm.xlu0 %367, %v342
      %v369 = vpop.permute.xlu0 %368
      %372 = vset.pattern.permute.xlu0 0
      %373 = vperm.xlu0 %372, %v343
      %v374 = vpop.permute.xlu0 %373
      %377 = vset.pattern.permute.xlu0 0
      %378 = vperm.xlu0 %377, %v344
      %v379 = vpop.permute.xlu0 %378
      %382 = vset.pattern.permute.xlu0 0
      %383 = vperm.xlu0 %382, %v345
      %v384 = vpop.permute.xlu0 %383
      %387 = vset.pattern.permute.xlu0 0
      %388 = vperm.xlu0 %387, %v346
      %v389 = vpop.permute.xlu0 %388
      %392 = vset.pattern.permute.xlu0 0
      %393 = vperm.xlu0 %392, %v347
      %v394 = vpop.permute.xlu0 %393
      %397 = vset.pattern.permute.xlu0 0
      %398 = vperm.xlu0 %397, %v348
      %v399 = vpop.permute.xlu0 %398
      %402 = vset.pattern.permute.xlu0 0
      %403 = vperm.xlu0 %402, %v349
      %v404 = vpop.permute.xlu0 %403
      %407 = vset.pattern.permute.xlu0 0
      %408 = vperm.xlu0 %407, %v350
      %v409 = vpop.permute.xlu0 %408
      %412 = vset.pattern.permute.xlu0 0
      %413 = vperm.xlu0 %412, %v351
      %v414 = vpop.permute.xlu0 %413
      %417 = vset.pattern.permute.xlu0 0
      %418 = vperm.xlu0 %417, %v352
      %v419 = vpop.permute.xlu0 %418
      %422 = vset.pattern.permute.xlu0 0
      %423 = vperm.xlu0 %422, %v353
      %v424 = vpop.permute.xlu0 %423
      %427 = vset.pattern.permute.xlu0 0
      %428 = vperm.xlu0 %427, %v354
      %v429 = vpop.permute.xlu0 %428
      %432 = vset.pattern.permute.xlu0 0
      %433 = vperm.xlu0 %432, %v355
      %v434 = vpop.permute.xlu0 %433
      %v436 = vmul.f32 %v324, %v359
      %v437 = vmul.f32 %v325, %v364
      %v438 = vmul.f32 %v326, %v369
      %v439 = vmul.f32 %v327, %v374
      %v440 = vmul.f32 %v328, %v379
      %v441 = vmul.f32 %v329, %v384
      %v442 = vmul.f32 %v330, %v389
      %v443 = vmul.f32 %v331, %v394
      %v444 = vmul.f32 %v332, %v399
      %v445 = vmul.f32 %v333, %v404
      %v446 = vmul.f32 %v334, %v409
      %v447 = vmul.f32 %v335, %v414
      %v448 = vmul.f32 %v336, %v419
      %v449 = vmul.f32 %v337, %v424
      %v450 = vmul.f32 %v338, %v429
      %v451 = vmul.f32 %v339, %v434
      %452 = vst [vmem:[#allocation3] sm:$0xff] %v436
      %453 = vst [vmem:[#allocation3 + $0x8] sm:$0xff] %v437
      %454 = vst [vmem:[#allocation3 + $0x10] sm:$0xff] %v438
      %455 = vst [vmem:[#allocation3 + $0x18] sm:$0xff] %v439
      %456 = vst [vmem:[#allocation3 + $0x20] sm:$0xff] %v440
      %457 = vst [vmem:[#allocation3 + $0x28] sm:$0xff] %v441
      %458 = vst [vmem:[#allocation3 + $0x30] sm:$0xff] %v442
      %459 = vst [vmem:[#allocation3 + $0x38] sm:$0xff] %v443
      %460 = vst [vmem:[#allocation3 + $0x40] sm:$0xff] %v444
      %461 = vst [vmem:[#allocation3 + $0x48] sm:$0xff] %v445
      %462 = vst [vmem:[#allocation3 + $0x50] sm:$0xff] %v446
      %463 = vst [vmem:[#allocation3 + $0x58] sm:$0xff] %v447
      %464 = vst [vmem:[#allocation3 + $0x60] sm:$0xff] %v448
      %465 = vst [vmem:[#allocation3 + $0x68] sm:$0xff] %v449
      %466 = vst [vmem:[#allocation3 + $0x70] sm:$0xff] %v450
      %467 = vst [vmem:[#allocation3 + $0x78] sm:$0xff] %v451
    $region21: #{tpu_custom_call.1} parent=1 // pred_fallthru
      _
    // Predicated region
    $region22: #{tpu_custom_call.1} parent=1 // pred_check
      _
    $region23: #{tpu_custom_call.1} parent=1 // pred_check_branch
      %469 = sbr.rel (0) target = $region25
    $region24: #{tpu_custom_call.1} parent=1 // pred_region
      %s471 = ssub.s32 2048, 2048
      %472 = vsyncadd [#allocation4], %s471
      %s473 = sshll.u32 [#allocation3], 4
      %s474 = int_to_ptr.vmem [resolvable:$true] %s473
      %479 = dma.vmem_to_hbm [thread:$0]  %s474, 2048, %s3, [#allocation4], 128, 128, 8
    $region25: #{tpu_custom_call.1} parent=1 // pred_fallthru
      _
    // Predicated region
    $region26: #{tpu_custom_call.1} parent=1 // pred_check
      _
    $region27: #{tpu_custom_call.1} parent=1 // pred_check_branch
      %481 = sbr.rel (0) target = $region29
    $region28: #{tpu_custom_call.1} parent=1 // pred_region
      %482 = dma.done [#allocation4], 2048
    $region29: #{tpu_custom_call.1} parent=1 // pred_fallthru
      _
    %483 = vsyncpa [#allocation4], 1

</llo_original>
